<compile_context>
chip_gen: v6e
topology: v6e:2x2x1
jax: 0.10.0
libtpu: 0.0.40
codegen_flags: <defaults>
</compile_context>

<pallas_src>
import jax
import jax.numpy as jnp
from jax.experimental import pallas as pl
from jax.experimental.pallas import tpu as pltpu

LANE = 128


def _round_up(n, m):
    return -(-n // m) * m


def dqn_kernel(x_ref,
               w1_ref, b1_ref,
               w2_ref, b2_ref,
               w3_ref, b3_ref,
               w4_ref, b4_ref,
               w5_ref, b5_ref,
               out_ref):
    # bf16 x bf16 matmuls on the MXU with f32 accumulation; bias add / ReLU in
    # f32 (v5e has no bf16 VPU and the VPU work is free filler); intermediates
    # are carried as bf16 between layers (identical numerics, half the spill).
    h = jnp.dot(x_ref[...], w1_ref[...],
                preferred_element_type=jnp.float32) + b1_ref[...]
    h = jnp.maximum(h, 0.0).astype(jnp.bfloat16)

    h = jnp.dot(h, w2_ref[...],
                preferred_element_type=jnp.float32) + b2_ref[...]
    h = jnp.maximum(h, 0.0).astype(jnp.bfloat16)

    h = jnp.dot(h, w3_ref[...],
                preferred_element_type=jnp.float32) + b3_ref[...]
    h = jnp.maximum(h, 0.0).astype(jnp.bfloat16)

    h = jnp.dot(h, w4_ref[...],
                preferred_element_type=jnp.float32) + b4_ref[...]
    h = jnp.maximum(h, 0.0).astype(jnp.bfloat16)

    out = jnp.dot(h, w5_ref[...],
                  preferred_element_type=jnp.float32) + b5_ref[...]
    out_ref[...] = out  # lane-dense (TB, 128) f32 store


def dqn_forward(x, params, *, block_batch=512):
    """x: (B, input_dim) float32. params: list of (W, b) with W as (in, out) f32."""
    B, input_dim = x.shape
    output_dim = params[-1][0].shape[1]

    # Adaptive batch tile: never pad a small batch up to a full block_batch.
    # 16 = bf16 sublane multiple (x is streamed as bf16).
    TB = min(block_batch, _round_up(B, 16))
    Bp = _round_up(B, TB)
    # Prefer >= 2 grid steps when the batch is big enough, so the "parallel"
    # batch axis can shard across v7x's two TensorCores.
    if Bp // TB < 2 and Bp >= 32:
        TB = _round_up(-(-Bp // 2), 16)
        Bp = _round_up(B, TB)

    N_pad = _round_up(output_dim, LANE)

    (w1, b1), (w2, b2), (w3, b3), (w4, b4), (w5, b5) = params

    # x: zero-pad batch only, cast to bf16, keep K = input_dim unpadded
    # (block last dim == full array dim is legal).
    xp = jnp.zeros((Bp, input_dim), jnp.bfloat16).at[:B, :].set(
        x.astype(jnp.bfloat16))

    # Last layer: pad N to 128 so the output store is lane-dense.
    w5p = jnp.zeros((w5.shape[0], N_pad), jnp.float32).at[:, :output_dim].set(w5)
    b5p = jnp.zeros((1, N_pad), jnp.float32).at[:, :output_dim].set(b5)

    # Weights DMA'd / held in VMEM as bf16; biases stay f32.
    ws = [w1.astype(jnp.bfloat16), w2.astype(jnp.bfloat16),
          w3.astype(jnp.bfloat16), w4.astype(jnp.bfloat16),
          w5p.astype(jnp.bfloat16)]
    bs = [b1, b2, b3, b4, b5p]

    flat_args = [xp]
    for w, b in zip(ws, bs):
        flat_args.append(w)
        flat_args.append(b)

    def batch_map(i):
        return (i, 0)

    def const_map(i):
        return (0, 0)

    in_specs = [pl.BlockSpec((TB, input_dim), batch_map)]
    for w, b in zip(ws, bs):
        in_specs.append(pl.BlockSpec(tuple(w.shape), const_map))   # VMEM-resident
        in_specs.append(pl.BlockSpec(tuple(b.shape), const_map))
    out_specs = pl.BlockSpec((TB, N_pad), batch_map)

    flops = 2 * Bp * sum(int(w.shape[0]) * int(w.shape[1]) for w in ws)
    bytes_accessed = (int(xp.size) * 2
                      + sum(int(w.size) * 2 for w in ws)
                      + sum(int(b.size) * 4 for b in bs)
                      + Bp * N_pad * 4)

    out_padded = pl.pallas_call(
        dqn_kernel,
        out_shape=jax.ShapeDtypeStruct((Bp, N_pad), jnp.float32),
        grid=(Bp // TB,),
        in_specs=in_specs,
        out_specs=out_specs,
        compiler_params=pltpu.CompilerParams(
            dimension_semantics=("parallel",)),
        cost_estimate=pl.CostEstimate(
            flops=flops, transcendentals=0, bytes_accessed=bytes_accessed),
    )(*flat_args)

    return out_padded[:B, :output_dim]


def init_params(key, input_dim, output_dim):
    """Deterministic init matching nn.Linear shapes (stored transposed, f32)."""
    dims = [(input_dim, 256), (256, 256), (256, 256), (256, 128), (128, output_dim)]
    params = []
    for (fan_in, fan_out) in dims:
        key, kw, kb = jax.random.split(key, 3)
        bound = 1.0 / jnp.sqrt(fan_in)
        w = jax.random.uniform(kw, (fan_in, fan_out), jnp.float32, -bound, bound)
        b = jax.random.uniform(kb, (1, fan_out), jnp.float32, -bound, bound)
        params.append((w, b))
    return params


def dqn_reference(x, params):
    """Reference with the same bf16-matmul / f32-accumulate numerics as the kernel."""
    h = x
    n = len(params)
    for i, (w, b) in enumerate(params):
        h = jnp.dot(h.astype(jnp.bfloat16), w.astype(jnp.bfloat16),
                    preferred_element_type=jnp.float32) + b
        if i < n - 1:
            h = jnp.maximum(h, 0.0)
    return h


if __name__ == "__main__":
    key = jax.random.PRNGKey(0)
    batch, input_dim, output_dim = 8, 16, 4

    key, kx = jax.random.split(key)
    x = jax.random.normal(kx, (batch, input_dim), jnp.float32)

    params = init_params(key, input_dim, output_dim)

    out = dqn_forward(x, params)
    jax.block_until_ready(out)

    ref = dqn_reference(x, params)
    assert out.shape == (batch, output_dim)
    assert jnp.allclose(out, ref, atol=2e-3, rtol=2e-3)

    print("KERNEL_OK")
</pallas_src>

<mosaic_0001>
module attributes {stable_mosaic.version = 11 : i64} {
  func.func @dqn_kernel(%arg0: i32, %arg1: memref<16x16xbf16, #tpu.memory_space<vmem>>, %arg2: memref<16x256xbf16, #tpu.memory_space<vmem>>, %arg3: memref<1x256xf32, #tpu.memory_space<vmem>>, %arg4: memref<256x256xbf16, #tpu.memory_space<vmem>>, %arg5: memref<1x256xf32, #tpu.memory_space<vmem>>, %arg6: memref<256x256xbf16, #tpu.memory_space<vmem>>, %arg7: memref<1x256xf32, #tpu.memory_space<vmem>>, %arg8: memref<256x128xbf16, #tpu.memory_space<vmem>>, %arg9: memref<1x128xf32, #tpu.memory_space<vmem>>, %arg10: memref<128x128xbf16, #tpu.memory_space<vmem>>, %arg11: memref<1x128xf32, #tpu.memory_space<vmem>>, %arg12: memref<16x128xf32, #tpu.memory_space<vmem>>) attributes {dimension_semantics = [#tpu.dimension_semantics<parallel>], iteration_bounds = array<i64: 1>, scalar_prefetch = 0 : i64, scratch_operands = 0 : i64, tpu.core_type = #tpu.core_type<tc>, window_params = [{transform_indices = @transform_0, window_bounds = array<i64: 16, 16>}, {pipeline_mode = #tpu.pipeline_mode<synchronous>, transform_indices = @transform_1, window_bounds = array<i64: 16, 256>}, {pipeline_mode = #tpu.pipeline_mode<synchronous>, transform_indices = @transform_2, window_bounds = array<i64: 1, 256>}, {pipeline_mode = #tpu.pipeline_mode<synchronous>, transform_indices = @transform_3, window_bounds = array<i64: 256, 256>}, {pipeline_mode = #tpu.pipeline_mode<synchronous>, transform_indices = @transform_4, window_bounds = array<i64: 1, 256>}, {pipeline_mode = #tpu.pipeline_mode<synchronous>, transform_indices = @transform_5, window_bounds = array<i64: 256, 256>}, {pipeline_mode = #tpu.pipeline_mode<synchronous>, transform_indices = @transform_6, window_bounds = array<i64: 1, 256>}, {pipeline_mode = #tpu.pipeline_mode<synchronous>, transform_indices = @transform_7, window_bounds = array<i64: 256, 128>}, {pipeline_mode = #tpu.pipeline_mode<synchronous>, transform_indices = @transform_8, window_bounds = array<i64: 1, 128>}, {pipeline_mode = #tpu.pipeline_mode<synchronous>, transform_indices = @transform_9, window_bounds = array<i64: 128, 128>}, {pipeline_mode = #tpu.pipeline_mode<synchronous>, transform_indices = @transform_10, window_bounds = array<i64: 1, 128>}, {transform_indices = @transform_11, window_bounds = array<i64: 16, 128>}]} {
    %c0 = arith.constant 0 : index
    %c0_0 = arith.constant 0 : index
    %0 = vector.load %arg1[%c0, %c0_0] : memref<16x16xbf16, #tpu.memory_space<vmem>>, vector<16x16xbf16>
    %c0_1 = arith.constant 0 : index
    %c0_2 = arith.constant 0 : index
    %1 = vector.load %arg2[%c0_1, %c0_2] : memref<16x256xbf16, #tpu.memory_space<vmem>>, vector<16x256xbf16>
    %cst = arith.constant dense<0.000000e+00> : vector<16x256xf32>
    %2 = tpu.matmul %0, %1, %cst {dimension_numbers = #tpu.dot_dimension_numbers<[1], [0], [0], [1], [0, 0, 1, 1], [], []>} : vector<16x16xbf16>, vector<16x256xbf16>, vector<16x256xf32> -> vector<16x256xf32>
    %c0_3 = arith.constant 0 : index
    %c0_4 = arith.constant 0 : index
    %3 = vector.load %arg3[%c0_3, %c0_4] : memref<1x256xf32, #tpu.memory_space<vmem>>, vector<1x256xf32>
    %4 = vector.broadcast %3 : vector<1x256xf32> to vector<16x256xf32>
    %5 = arith.addf %2, %4 : vector<16x256xf32>
    %cst_5 = arith.constant 0.000000e+00 : f32
    %6 = vector.broadcast %cst_5 : f32 to vector<16x256xf32>
    %7 = arith.maximumf %5, %6 : vector<16x256xf32>
    %8 = arith.truncf %7 : vector<16x256xf32> to vector<16x256xbf16>
    %c0_6 = arith.constant 0 : index
    %c0_7 = arith.constant 0 : index
    %9 = vector.load %arg4[%c0_6, %c0_7] : memref<256x256xbf16, #tpu.memory_space<vmem>>, vector<256x256xbf16>
    %cst_8 = arith.constant dense<0.000000e+00> : vector<16x256xf32>
    %10 = tpu.matmul %8, %9, %cst_8 {dimension_numbers = #tpu.dot_dimension_numbers<[1], [0], [0], [1], [0, 0, 1, 1], [], []>} : vector<16x256xbf16>, vector<256x256xbf16>, vector<16x256xf32> -> vector<16x256xf32>
    %c0_9 = arith.constant 0 : index
    %c0_10 = arith.constant 0 : index
    %11 = vector.load %arg5[%c0_9, %c0_10] : memref<1x256xf32, #tpu.memory_space<vmem>>, vector<1x256xf32>
    %12 = vector.broadcast %11 : vector<1x256xf32> to vector<16x256xf32>
    %13 = arith.addf %10, %12 : vector<16x256xf32>
    %cst_11 = arith.constant 0.000000e+00 : f32
    %14 = vector.broadcast %cst_11 : f32 to vector<16x256xf32>
    %15 = arith.maximumf %13, %14 : vector<16x256xf32>
    %16 = arith.truncf %15 : vector<16x256xf32> to vector<16x256xbf16>
    %c0_12 = arith.constant 0 : index
    %c0_13 = arith.constant 0 : index
    %17 = vector.load %arg6[%c0_12, %c0_13] : memref<256x256xbf16, #tpu.memory_space<vmem>>, vector<256x256xbf16>
    %cst_14 = arith.constant dense<0.000000e+00> : vector<16x256xf32>
    %18 = tpu.matmul %16, %17, %cst_14 {dimension_numbers = #tpu.dot_dimension_numbers<[1], [0], [0], [1], [0, 0, 1, 1], [], []>} : vector<16x256xbf16>, vector<256x256xbf16>, vector<16x256xf32> -> vector<16x256xf32>
    %c0_15 = arith.constant 0 : index
    %c0_16 = arith.constant 0 : index
    %19 = vector.load %arg7[%c0_15, %c0_16] : memref<1x256xf32, #tpu.memory_space<vmem>>, vector<1x256xf32>
    %20 = vector.broadcast %19 : vector<1x256xf32> to vector<16x256xf32>
    %21 = arith.addf %18, %20 : vector<16x256xf32>
    %cst_17 = arith.constant 0.000000e+00 : f32
    %22 = vector.broadcast %cst_17 : f32 to vector<16x256xf32>
    %23 = arith.maximumf %21, %22 : vector<16x256xf32>
    %24 = arith.truncf %23 : vector<16x256xf32> to vector<16x256xbf16>
    %c0_18 = arith.constant 0 : index
    %c0_19 = arith.constant 0 : index
    %25 = vector.load %arg8[%c0_18, %c0_19] : memref<256x128xbf16, #tpu.memory_space<vmem>>, vector<256x128xbf16>
    %cst_20 = arith.constant dense<0.000000e+00> : vector<16x128xf32>
    %26 = tpu.matmul %24, %25, %cst_20 {dimension_numbers = #tpu.dot_dimension_numbers<[1], [0], [0], [1], [0, 0, 1, 1], [], []>} : vector<16x256xbf16>, vector<256x128xbf16>, vector<16x128xf32> -> vector<16x128xf32>
    %c0_21 = arith.constant 0 : index
    %c0_22 = arith.constant 0 : index
    %27 = vector.load %arg9[%c0_21, %c0_22] : memref<1x128xf32, #tpu.memory_space<vmem>>, vector<1x128xf32>
    %28 = vector.broadcast %27 : vector<1x128xf32> to vector<16x128xf32>
    %29 = arith.addf %26, %28 : vector<16x128xf32>
    %cst_23 = arith.constant 0.000000e+00 : f32
    %30 = vector.broadcast %cst_23 : f32 to vector<16x128xf32>
    %31 = arith.maximumf %29, %30 : vector<16x128xf32>
    %32 = arith.truncf %31 : vector<16x128xf32> to vector<16x128xbf16>
    %c0_24 = arith.constant 0 : index
    %c0_25 = arith.constant 0 : index
    %33 = vector.load %arg10[%c0_24, %c0_25] : memref<128x128xbf16, #tpu.memory_space<vmem>>, vector<128x128xbf16>
    %cst_26 = arith.constant dense<0.000000e+00> : vector<16x128xf32>
    %34 = tpu.matmul %32, %33, %cst_26 {dimension_numbers = #tpu.dot_dimension_numbers<[1], [0], [0], [1], [0, 0, 1, 1], [], []>} : vector<16x128xbf16>, vector<128x128xbf16>, vector<16x128xf32> -> vector<16x128xf32>
    %c0_27 = arith.constant 0 : index
    %c0_28 = arith.constant 0 : index
    %35 = vector.load %arg11[%c0_27, %c0_28] : memref<1x128xf32, #tpu.memory_space<vmem>>, vector<1x128xf32>
    %36 = vector.broadcast %35 : vector<1x128xf32> to vector<16x128xf32>
    %37 = arith.addf %34, %36 : vector<16x128xf32>
    %c0_29 = arith.constant 0 : index
    %c0_30 = arith.constant 0 : index
    %38 = vector.load %arg12[%c0_29, %c0_30] : memref<16x128xf32, #tpu.memory_space<vmem>>, vector<16x128xf32>
    tpu.vector_store %arg12[%c0_29, %c0_30], %37 {strides = array<i32>} : memref<16x128xf32, #tpu.memory_space<vmem>>, vector<16x128xf32>,
    return
  }
  func.func @transform_0(%arg0: i32) -> (i32, i32) {
    %c0_i32 = arith.constant 0 : i32
    %c0_i32_0 = arith.constant 0 : i32
    return %arg0, %c0_i32 : i32, i32
  }
  func.func @transform_1(%arg0: i32) -> (i32, i32) {
    %c0_i32 = arith.constant 0 : i32
    %c0_i32_0 = arith.constant 0 : i32
    %c0_i32_1 = arith.constant 0 : i32
    return %c0_i32, %c0_i32_0 : i32, i32
  }
  func.func @transform_2(%arg0: i32) -> (i32, i32) {
    %c0_i32 = arith.constant 0 : i32
    %c0_i32_0 = arith.constant 0 : i32
    %c0_i32_1 = arith.constant 0 : i32
    return %c0_i32, %c0_i32_0 : i32, i32
  }
  func.func @transform_3(%arg0: i32) -> (i32, i32) {
    %c0_i32 = arith.constant 0 : i32
    %c0_i32_0 = arith.constant 0 : i32
    %c0_i32_1 = arith.constant 0 : i32
    return %c0_i32, %c0_i32_0 : i32, i32
  }
  func.func @transform_4(%arg0: i32) -> (i32, i32) {
    %c0_i32 = arith.constant 0 : i32
    %c0_i32_0 = arith.constant 0 : i32
    %c0_i32_1 = arith.constant 0 : i32
    return %c0_i32, %c0_i32_0 : i32, i32
  }
  func.func @transform_5(%arg0: i32) -> (i32, i32) {
    %c0_i32 = arith.constant 0 : i32
    %c0_i32_0 = arith.constant 0 : i32
    %c0_i32_1 = arith.constant 0 : i32
    return %c0_i32, %c0_i32_0 : i32, i32
  }
  func.func @transform_6(%arg0: i32) -> (i32, i32) {
    %c0_i32 = arith.constant 0 : i32
    %c0_i32_0 = arith.constant 0 : i32
    %c0_i32_1 = arith.constant 0 : i32
    return %c0_i32, %c0_i32_0 : i32, i32
  }
  func.func @transform_7(%arg0: i32) -> (i32, i32) {
    %c0_i32 = arith.constant 0 : i32
    %c0_i32_0 = arith.constant 0 : i32
    %c0_i32_1 = arith.constant 0 : i32
    return %c0_i32, %c0_i32_0 : i32, i32
  }
  func.func @transform_8(%arg0: i32) -> (i32, i32) {
    %c0_i32 = arith.constant 0 : i32
    %c0_i32_0 = arith.constant 0 : i32
    %c0_i32_1 = arith.constant 0 : i32
    return %c0_i32, %c0_i32_0 : i32, i32
  }
  func.func @transform_9(%arg0: i32) -> (i32, i32) {
    %c0_i32 = arith.constant 0 : i32
    %c0_i32_0 = arith.constant 0 : i32
    %c0_i32_1 = arith.constant 0 : i32
    return %c0_i32, %c0_i32_0 : i32, i32
  }
  func.func @transform_10(%arg0: i32) -> (i32, i32) {
    %c0_i32 = arith.constant 0 : i32
    %c0_i32_0 = arith.constant 0 : i32
    %c0_i32_1 = arith.constant 0 : i32
    return %c0_i32, %c0_i32_0 : i32, i32
  }
  func.func @transform_11(%arg0: i32) -> (i32, i32) {
    %c0_i32 = arith.constant 0 : i32
    %c0_i32_0 = arith.constant 0 : i32
    return %arg0, %c0_i32 : i32, i32
  }
}

</mosaic_0001>

<llo_original>
// kernel: tpu_custom_call.1
$region0: #{tpu_custom_call.1}
  #allocation0 [shape = 'u32[]', space=smem, size = 0x4, offset = 0x4, fixed_abs, tag = 'smem constant byte address 0x4 - core index']
  #allocation1 [shape = 'u32[144,128]{1,0:T(1,128)}', space=vmem, size = 0x12000, scoped, tag = 'internal scratch']
  %s0 = inlined_call_operand.hbm [shape: bf16[16,16], index: 0, kind: input, shape index: {}]
  %s1 = inlined_call_operand.hbm [shape: bf16[16,256], index: 1, kind: input, shape index: {}]
  %s2 = inlined_call_operand.vmem [shape: f32[1,256], index: 2, kind: input, shape index: {}]
  %s3 = inlined_call_operand.hbm [shape: bf16[256,256], index: 3, kind: input, shape index: {}]
  %s4 = inlined_call_operand.vmem [shape: f32[1,256], index: 4, kind: input, shape index: {}]
  %s5 = inlined_call_operand.hbm [shape: bf16[256,256], index: 5, kind: input, shape index: {}]
  %s6 = inlined_call_operand.vmem [shape: f32[1,256], index: 6, kind: input, shape index: {}]
  %s7 = inlined_call_operand.hbm [shape: bf16[256,128], index: 7, kind: input, shape index: {}]
  %s8 = inlined_call_operand.vmem [shape: f32[1,128], index: 8, kind: input, shape index: {}]
  %s9 = inlined_call_operand.hbm [shape: bf16[128,128], index: 9, kind: input, shape index: {}]
  %s10 = inlined_call_operand.vmem [shape: f32[1,128], index: 10, kind: input, shape index: {}]
  %s11 = inlined_call_operand.hbm [shape: f32[16,128], index: 11, kind: output, shape index: {}]
  %s12 = sld [smem:[#allocation0]]
  $region78: #{tpu_custom_call.1} parent=0
    _
  %s14 = ssub.s32 1, %s12
  %s15 = scalar_select 0, %s14, %s12
  $region1: #{tpu_custom_call.1} parent=0
    #allocation2 [shape = 'u8[4096]{0}', space=vmem, size = 0x1000, scoped, tag = 'input window, operand 0, single buffered']
    #allocation3 [shape = 's32[1]{0}', space=sflag, size = 0x4, scoped, tag = 'scoped memory for tpu_custom_call.1']
    #allocation4 [shape = 's32[1]{0}', space=sflag, size = 0x4, scoped, tag = 'scoped memory for tpu_custom_call.1']
    #allocation5 [shape = 'u8[8192]{0}', space=vmem, size = 0x2000, scoped, tag = 'input window, operand 1, single buffered']
    #allocation6 [shape = 's32[1]{0}', space=sflag, size = 0x4, scoped, tag = 'scoped memory for tpu_custom_call.1']
    #allocation7 [shape = 'u8[131072]{0}', space=vmem, size = 0x20000, scoped, tag = 'input window, operand 3, single buffered']
    #allocation8 [shape = 'u8[131072]{0}', space=vmem, size = 0x20000, scoped, tag = 'input window, operand 5, single buffered']
    #allocation9 [shape = 's32[1]{0}', space=sflag, size = 0x4, scoped, tag = 'scoped memory for tpu_custom_call.1']
    #allocation10 [shape = 'u8[65536]{0}', space=vmem, size = 0x10000, scoped, tag = 'input window, operand 7, single buffered']
    #allocation11 [shape = 'u8[32768]{0}', space=vmem, size = 0x8000, scoped, tag = 'input window, operand 9, single buffered']
    #allocation12 [shape = 's32[1]{0}', space=sflag, size = 0x4, scoped, tag = 'scoped memory for tpu_custom_call.1']
    #allocation13 [shape = 'u8[8192]{0}', space=vmem, size = 0x2000, scoped, tag = 'output window, operand 0, single buffered']
    %16 = vsyncpa [#allocation3], 0
    %17 = vsyncpa [#allocation6], 0
    %18 = vsyncpa [#allocation9], 0
    %19 = vsyncpa [#allocation12], 0
    %20 = vsyncpa [#allocation4], 0
    // Predicated region
    $region2: #{tpu_custom_call.1} parent=1 // pred_check
      _
    $region3: #{tpu_custom_call.1} parent=1 // pred_check_branch
      %22 = sbr.rel (0) target = $region5
    $region4: #{tpu_custom_call.1} parent=1 // pred_region
      %s24 = ssub.s32 128, 128
      %25 = vsyncadd [#allocation3], %s24
      %s26 = sshll.u32 [#allocation2], 4
      %s27 = int_to_ptr.vmem [resolvable:$true] %s26
      %32 = dma.hbm_to_vmem [thread:$0]  %s0, 128, %s27, [#allocation3], 64, 64, 4
    $region5: #{tpu_custom_call.1} parent=1 // pred_fallthru
      _
    // Predicated region
    $region6: #{tpu_custom_call.1} parent=1 // pred_check
      _
    $region7: #{tpu_custom_call.1} parent=1 // pred_check_branch
      %34 = sbr.rel (0) target = $region9
    $region8: #{tpu_custom_call.1} parent=1 // pred_region
      %s36 = ssub.s32 256, 256
      %37 = vsyncadd [#allocation6], %s36
      %s38 = sshll.u32 [#allocation5], 4
      %s39 = int_to_ptr.vmem [resolvable:$true] %s38
      %44 = dma.hbm_to_vmem [thread:$0]  %s1, 256, %s39, [#allocation6], 128, 128, 8
    $region9: #{tpu_custom_call.1} parent=1 // pred_fallthru
      _
    // Predicated region
    $region10: #{tpu_custom_call.1} parent=1 // pred_check
      _
    $region11: #{tpu_custom_call.1} parent=1 // pred_check_branch
      %46 = sbr.rel (0) target = $region13
    $region12: #{tpu_custom_call.1} parent=1 // pred_region
      _
    $region13: #{tpu_custom_call.1} parent=1 // pred_fallthru
      _
    // Predicated region
    $region14: #{tpu_custom_call.1} parent=1 // pred_check
      _
    $region15: #{tpu_custom_call.1} parent=1 // pred_check_branch
      %48 = sbr.rel (0) target = $region17
    $region16: #{tpu_custom_call.1} parent=1 // pred_region
      %s50 = ssub.s32 4096, 4096
      %51 = vsyncadd [#allocation6], %s50
      %s52 = sshll.u32 [#allocation7], 4
      %s53 = int_to_ptr.vmem [resolvable:$true] %s52
      %58 = dma.hbm_to_vmem [thread:$0]  %s3, 4096, %s53, [#allocation6], 128, 128, 8
    $region17: #{tpu_custom_call.1} parent=1 // pred_fallthru
      _
    // Predicated region
    $region18: #{tpu_custom_call.1} parent=1 // pred_check
      _
    $region19: #{tpu_custom_call.1} parent=1 // pred_check_branch
      %60 = sbr.rel (0) target = $region21
    $region20: #{tpu_custom_call.1} parent=1 // pred_region
      _
    $region21: #{tpu_custom_call.1} parent=1 // pred_fallthru
      _
    // Predicated region
    $region22: #{tpu_custom_call.1} parent=1 // pred_check
      _
    $region23: #{tpu_custom_call.1} parent=1 // pred_check_branch
      %62 = sbr.rel (0) target = $region25
    $region24: #{tpu_custom_call.1} parent=1 // pred_region
      %s64 = ssub.s32 4096, 4096
      %65 = vsyncadd [#allocation9], %s64
      %s66 = sshll.u32 [#allocation8], 4
      %s67 = int_to_ptr.vmem [resolvable:$true] %s66
      %72 = dma.hbm_to_vmem [thread:$0]  %s5, 4096, %s67, [#allocation9], 128, 128, 8
    $region25: #{tpu_custom_call.1} parent=1 // pred_fallthru
      _
    // Predicated region
    $region26: #{tpu_custom_call.1} parent=1 // pred_check
      _
    $region27: #{tpu_custom_call.1} parent=1 // pred_check_branch
      %74 = sbr.rel (0) target = $region29
    $region28: #{tpu_custom_call.1} parent=1 // pred_region
      _
    $region29: #{tpu_custom_call.1} parent=1 // pred_fallthru
      _
    // Predicated region
    $region30: #{tpu_custom_call.1} parent=1 // pred_check
      _
    $region31: #{tpu_custom_call.1} parent=1 // pred_check_branch
      %76 = sbr.rel (0) target = $region33
    $region32: #{tpu_custom_call.1} parent=1 // pred_region
      %s78 = ssub.s32 2048, 2048
      %79 = vsyncadd [#allocation9], %s78
      %s80 = sshll.u32 [#allocation10], 4
      %s81 = int_to_ptr.vmem [resolvable:$true] %s80
      %86 = dma.hbm_to_vmem [thread:$0]  %s7, 2048, %s81, [#allocation9], 64, 64, 4
    $region33: #{tpu_custom_call.1} parent=1 // pred_fallthru
      _
    // Predicated region
    $region34: #{tpu_custom_call.1} parent=1 // pred_check
      _
    $region35: #{tpu_custom_call.1} parent=1 // pred_check_branch
      %88 = sbr.rel (0) target = $region37
    $region36: #{tpu_custom_call.1} parent=1 // pred_region
      _
    $region37: #{tpu_custom_call.1} parent=1 // pred_fallthru
      _
    // Predicated region
    $region38: #{tpu_custom_call.1} parent=1 // pred_check
      _
    $region39: #{tpu_custom_call.1} parent=1 // pred_check_branch
      %90 = sbr.rel (0) target = $region41
    $region40: #{tpu_custom_call.1} parent=1 // pred_region
      %s92 = ssub.s32 1024, 1024
      %93 = vsyncadd [#allocation12], %s92
      %s94 = sshll.u32 [#allocation11], 4
      %s95 = int_to_ptr.vmem [resolvable:$true] %s94
      %100 = dma.hbm_to_vmem [thread:$0]  %s9, 1024, %s95, [#allocation12], 64, 64, 4
    $region41: #{tpu_custom_call.1} parent=1 // pred_fallthru
      _
    // Predicated region
    $region42: #{tpu_custom_call.1} parent=1 // pred_check
      _
    $region43: #{tpu_custom_call.1} parent=1 // pred_check_branch
      %102 = sbr.rel (0) target = $region45
    $region44: #{tpu_custom_call.1} parent=1 // pred_region
      _
    $region45: #{tpu_custom_call.1} parent=1 // pred_fallthru
      _
    // Predicated region
    $region46: #{tpu_custom_call.1} parent=1 // pred_check
      _
    $region47: #{tpu_custom_call.1} parent=1 // pred_check_branch
      %104 = sbr.rel (0) target = $region49
    $region48: #{tpu_custom_call.1} parent=1 // pred_region
      %105 = dma.done [#allocation3], 128
    $region49: #{tpu_custom_call.1} parent=1 // pred_fallthru
      _
    // Predicated region
    $region50: #{tpu_custom_call.1} parent=1 // pred_check
      _
    $region51: #{tpu_custom_call.1} parent=1 // pred_check_branch
      %107 = sbr.rel (0) target = $region53
    $region52: #{tpu_custom_call.1} parent=1 // pred_region
      %108 = dma.done [#allocation6], 256
    $region53: #{tpu_custom_call.1} parent=1 // pred_fallthru
      _
    // Predicated region
    $region54: #{tpu_custom_call.1} parent=1 // pred_check
      _
    $region55: #{tpu_custom_call.1} parent=1 // pred_check_branch
      %110 = sbr.rel (0) target = $region57
    $region56: #{tpu_custom_call.1} parent=1 // pred_region
      %111 = dma.done [#allocation6], 4096
    $region57: #{tpu_custom_call.1} parent=1 // pred_fallthru
      _
    // Predicated region
    $region58: #{tpu_custom_call.1} parent=1 // pred_check
      _
    $region59: #{tpu_custom_call.1} parent=1 // pred_check_branch
      %113 = sbr.rel (0) target = $region61
    $region60: #{tpu_custom_call.1} parent=1 // pred_region
      %114 = dma.done [#allocation9], 4096
    $region61: #{tpu_custom_call.1} parent=1 // pred_fallthru
      _
    // Predicated region
    $region62: #{tpu_custom_call.1} parent=1 // pred_check
      _
    $region63: #{tpu_custom_call.1} parent=1 // pred_check_branch
      %116 = sbr.rel (0) target = $region65
    $region64: #{tpu_custom_call.1} parent=1 // pred_region
      %117 = dma.done [#allocation9], 2048
    $region65: #{tpu_custom_call.1} parent=1 // pred_fallthru
      _
    // Predicated region
    $region66: #{tpu_custom_call.1} parent=1 // pred_check
      _
    $region67: #{tpu_custom_call.1} parent=1 // pred_check_branch
      %119 = sbr.rel (0) target = $region69
    $region68: #{tpu_custom_call.1} parent=1 // pred_region
      %120 = dma.done [#allocation12], 1024
    $region69: #{tpu_custom_call.1} parent=1 // pred_fallthru
      _
    %v122 = vld [vmem:[#allocation2] sm:$0xf]
    %v123 = vld [vmem:[#allocation2 + $0x4] sm:$0xf]
    %v124 = vld [vmem:[#allocation5] sm:$0xff]
    %v125 = vld [vmem:[#allocation5 + $0x8] sm:$0xff]
    %v126 = vld [vmem:[%s2] sm:$0x3]
    %v128 = vlaneseq
    %v129 = vshrl.u32 %v128, 7
    %v130 = vsub.s32 0, %v129
    %v131 = vrot.slane %v126, %v130
    %v132 = vlaneseq
    %v133 = vshrl.u32 %v132, 7
    %v134 = vsub.s32 1, %v133
    %v135 = vrot.slane %v126, %v134
    %v140 = vunpack.c.l.b16 %v122
    %v141 = vunpack.c.l.b16 %v123
    %v142 = vpack.c.b16 %v141, %v140
    %v145 = vunpack.c.l.b16 %v124
    %v146 = vunpack.c.h.b16 %v124
    %v147 = vunpack.c.l.b16 %v125
    %v148 = vunpack.c.h.b16 %v125
    %v149 = vpack.c.b16 %v147, %v145
    %v150 = vpack.c.b16 %v148, %v146
    %vm153 = vcmask 130048
    %v155 = vsel %vm153, %v142, 0
    %157 = vmatprep.subr.bf16.mxu0 0
    %158 = vmatpush1.bf16.msra.mxu0 0
    %159 = vmatprep.subr.bf16.mxu0 0
    %160 = vmatpush1.bf16.msra.mxu0 0
    %161 = vmatprep.subr.bf16.mxu0 0
    %162 = vmatpush1.bf16.msra.mxu0 0
    %163 = vmatprep.subr.bf16.mxu0 0
    %164 = vmatpush1.bf16.msra.mxu0 0
    %165 = vmatprep.subr.bf16.mxu0 0
    %166 = vmatpush1.bf16.msra.mxu0 0
    %167 = vmatprep.subr.bf16.mxu0 0
    %168 = vmatpush1.bf16.msra.mxu0 0
    %169 = vmatprep.subr.bf16.mxu0 0
    %170 = vmatpush1.bf16.msra.mxu0 0
    %171 = vmatprep.subr.bf16.mxu0 %v150
    %172 = vmatpush1.bf16.msra.mxu0 %v149
    %173 = vmatprep.subr.bf16.mxu0 0
    %174 = vmatpush2.bf16.msra.mxu0 0
    %175 = vmatprep.subr.bf16.mxu0 0
    %176 = vmatpush2.bf16.msra.mxu0 0
    %177 = vmatprep.subr.bf16.mxu0 0
    %178 = vmatpush2.bf16.msra.mxu0 0
    %179 = vmatprep.subr.bf16.mxu0 0
    %180 = vmatpush2.bf16.msra.mxu0 0
    %181 = vmatprep.subr.bf16.mxu0 0
    %182 = vmatpush2.bf16.msra.mxu0 0
    %183 = vmatprep.subr.bf16.mxu0 0
    %184 = vmatpush2.bf16.msra.mxu0 0
    %185 = vmatprep.subr.bf16.mxu0 0
    %186 = vmatpush2.bf16.msra.mxu0 0
    %187 = vmatprep.subr.bf16.mxu0 0
    %188 = vmatpush2.bf16.msra.mxu0 0
    %189 = vmatprep.mubr.bf16.mxu0 0
    %190 = vmatmul.mubr.bf16.gmra.mxu0 %v155
    %v191 = vpop.f32.mrf.mxu0
    %v192 = vadd.f32 %v131, %v191
    %v193 = vpop.f32.mrf.mxu0
    %v194 = vadd.f32 %v135, %v193
    %v195 = vpop.f32.mrf.mxu0
    %v196 = vadd.f32 %v131, %v195
    %v197 = vpop.f32.mrf.mxu0
    %v198 = vadd.f32 %v135, %v197
    %199 = vdwg.mxu0
    %v200 = vmax.f32 %v192, 0.0
    %v201 = vmax.f32 %v194, 0.0
    %v202 = vmax.f32 %v196, 0.0
    %v203 = vmax.f32 %v198, 0.0
    %v204 = vpack.c.bf16 %v202, %v200
    %v205 = vpack.c.bf16 %v203, %v201
    %v206 = vld [vmem:[#allocation7] sm:$0xff]
    %v207 = vld [vmem:[#allocation7 + $0x8] sm:$0xff]
    %v208 = vld [vmem:[#allocation7 + $0x10] sm:$0xff]
    %v209 = vld [vmem:[#allocation7 + $0x18] sm:$0xff]
    %v210 = vld [vmem:[#allocation7 + $0x20] sm:$0xff]
    %v211 = vld [vmem:[#allocation7 + $0x28] sm:$0xff]
    %v212 = vld [vmem:[#allocation7 + $0x30] sm:$0xff]
    %v213 = vld [vmem:[#allocation7 + $0x38] sm:$0xff]
    %v214 = vld [vmem:[#allocation7 + $0x40] sm:$0xff]
    %v215 = vld [vmem:[#allocation7 + $0x48] sm:$0xff]
    %v216 = vld [vmem:[#allocation7 + $0x50] sm:$0xff]
    %v217 = vld [vmem:[#allocation7 + $0x58] sm:$0xff]
    %v218 = vld [vmem:[#allocation7 + $0x60] sm:$0xff]
    %v219 = vld [vmem:[#allocation7 + $0x68] sm:$0xff]
    %v220 = vld [vmem:[#allocation7 + $0x70] sm:$0xff]
    %v221 = vld [vmem:[#allocation7 + $0x78] sm:$0xff]
    %v222 = vld [vmem:[#allocation7 + $0x80] sm:$0xff]
    %v223 = vld [vmem:[#allocation7 + $0x88] sm:$0xff]
    %v224 = vld [vmem:[#allocation7 + $0x90] sm:$0xff]
    %v225 = vld [vmem:[#allocation7 + $0x98] sm:$0xff]
    %v226 = vld [vmem:[#allocation7 + $0xa0] sm:$0xff]
    %v227 = vld [vmem:[#allocation7 + $0xa8] sm:$0xff]
    %v228 = vld [vmem:[#allocation7 + $0xb0] sm:$0xff]
    %v229 = vld [vmem:[#allocation7 + $0xb8] sm:$0xff]
    %v230 = vld [vmem:[#allocation7 + $0xc0] sm:$0xff]
    %v231 = vld [vmem:[#allocation7 + $0xc8] sm:$0xff]
    %v232 = vld [vmem:[#allocation7 + $0xd0] sm:$0xff]
    %v233 = vld [vmem:[#allocation7 + $0xd8] sm:$0xff]
    %v234 = vld [vmem:[#allocation7 + $0xe0] sm:$0xff]
    %v235 = vld [vmem:[#allocation7 + $0xe8] sm:$0xff]
    %v236 = vld [vmem:[#allocation7 + $0xf0] sm:$0xff]
    %v237 = vld [vmem:[#allocation7 + $0xf8] sm:$0xff]
    %v238 = vld [vmem:[%s4] sm:$0x3]
    %v240 = vlaneseq
    %v241 = vshrl.u32 %v240, 7
    %v242 = vsub.s32 0, %v241
    %v243 = vrot.slane %v238, %v242
    %v244 = vlaneseq
    %v245 = vshrl.u32 %v244, 7
    %v246 = vsub.s32 1, %v245
    %v247 = vrot.slane %v238, %v246
    %v282 = vunpack.c.l.b16 %v206
    %v283 = vunpack.c.h.b16 %v206
    %v284 = vunpack.c.l.b16 %v207
    %v285 = vunpack.c.h.b16 %v207
    %v286 = vunpack.c.l.b16 %v208
    %v287 = vunpack.c.h.b16 %v208
    %v288 = vunpack.c.l.b16 %v209
    %v289 = vunpack.c.h.b16 %v209
    %v290 = vunpack.c.l.b16 %v210
    %v291 = vunpack.c.h.b16 %v210
    %v292 = vunpack.c.l.b16 %v211
    %v293 = vunpack.c.h.b16 %v211
    %v294 = vunpack.c.l.b16 %v212
    %v295 = vunpack.c.h.b16 %v212
    %v296 = vunpack.c.l.b16 %v213
    %v297 = vunpack.c.h.b16 %v213
    %v298 = vunpack.c.l.b16 %v214
    %v299 = vunpack.c.h.b16 %v214
    %v300 = vunpack.c.l.b16 %v215
    %v301 = vunpack.c.h.b16 %v215
    %v302 = vunpack.c.l.b16 %v216
    %v303 = vunpack.c.h.b16 %v216
    %v304 = vunpack.c.l.b16 %v217
    %v305 = vunpack.c.h.b16 %v217
    %v306 = vunpack.c.l.b16 %v218
    %v307 = vunpack.c.h.b16 %v218
    %v308 = vunpack.c.l.b16 %v219
    %v309 = vunpack.c.h.b16 %v219
    %v310 = vunpack.c.l.b16 %v220
    %v311 = vunpack.c.h.b16 %v220
    %v312 = vunpack.c.l.b16 %v221
    %v313 = vunpack.c.h.b16 %v221
    %v314 = vunpack.c.l.b16 %v222
    %v315 = vunpack.c.h.b16 %v222
    %v316 = vunpack.c.l.b16 %v223
    %v317 = vunpack.c.h.b16 %v223
    %v318 = vunpack.c.l.b16 %v224
    %v319 = vunpack.c.h.b16 %v224
    %v320 = vunpack.c.l.b16 %v225
    %v321 = vunpack.c.h.b16 %v225
    %v322 = vunpack.c.l.b16 %v226
    %v323 = vunpack.c.h.b16 %v226
    %v324 = vunpack.c.l.b16 %v227
    %v325 = vunpack.c.h.b16 %v227
    %v326 = vunpack.c.l.b16 %v228
    %v327 = vunpack.c.h.b16 %v228
    %v328 = vunpack.c.l.b16 %v229
    %v329 = vunpack.c.h.b16 %v229
    %v330 = vunpack.c.l.b16 %v230
    %v331 = vunpack.c.h.b16 %v230
    %v332 = vunpack.c.l.b16 %v231
    %v333 = vunpack.c.h.b16 %v231
    %v334 = vunpack.c.l.b16 %v232
    %v335 = vunpack.c.h.b16 %v232
    %v336 = vunpack.c.l.b16 %v233
    %v337 = vunpack.c.h.b16 %v233
    %v338 = vunpack.c.l.b16 %v234
    %v339 = vunpack.c.h.b16 %v234
    %v340 = vunpack.c.l.b16 %v235
    %v341 = vunpack.c.h.b16 %v235
    %v342 = vunpack.c.l.b16 %v236
    %v343 = vunpack.c.h.b16 %v236
    %v344 = vunpack.c.l.b16 %v237
    %v345 = vunpack.c.h.b16 %v237
    %v346 = vpack.c.b16 %v284, %v282
    %v347 = vpack.c.b16 %v285, %v283
    %v348 = vpack.c.b16 %v288, %v286
    %v349 = vpack.c.b16 %v289, %v287
    %v350 = vpack.c.b16 %v292, %v290
    %v351 = vpack.c.b16 %v293, %v291
    %v352 = vpack.c.b16 %v296, %v294
    %v353 = vpack.c.b16 %v297, %v295
    %v354 = vpack.c.b16 %v300, %v298
    %v355 = vpack.c.b16 %v301, %v299
    %v356 = vpack.c.b16 %v304, %v302
    %v357 = vpack.c.b16 %v305, %v303
    %v358 = vpack.c.b16 %v308, %v306
    %v359 = vpack.c.b16 %v309, %v307
    %v360 = vpack.c.b16 %v312, %v310
    %v361 = vpack.c.b16 %v313, %v311
    %v362 = vpack.c.b16 %v316, %v314
    %v363 = vpack.c.b16 %v317, %v315
    %v364 = vpack.c.b16 %v320, %v318
    %v365 = vpack.c.b16 %v321, %v319
    %v366 = vpack.c.b16 %v324, %v322
    %v367 = vpack.c.b16 %v325, %v323
    %v368 = vpack.c.b16 %v328, %v326
    %v369 = vpack.c.b16 %v329, %v327
    %v370 = vpack.c.b16 %v332, %v330
    %v371 = vpack.c.b16 %v333, %v331
    %v372 = vpack.c.b16 %v336, %v334
    %v373 = vpack.c.b16 %v337, %v335
    %v374 = vpack.c.b16 %v340, %v338
    %v375 = vpack.c.b16 %v341, %v339
    %v376 = vpack.c.b16 %v344, %v342
    %v377 = vpack.c.b16 %v345, %v343
    %410 = vmatprep.subr.bf16.mxu0 %v361
    %411 = vmatpush1.bf16.msra.mxu0 %v360
    %412 = vmatprep.subr.bf16.mxu0 %v359
    %413 = vmatpush1.bf16.msra.mxu0 %v358
    %414 = vmatprep.subr.bf16.mxu0 %v357
    %415 = vmatpush1.bf16.msra.mxu0 %v356
    %416 = vmatprep.subr.bf16.mxu0 %v355
    %417 = vmatpush1.bf16.msra.mxu0 %v354
    %418 = vmatprep.subr.bf16.mxu0 %v353
    %419 = vmatpush1.bf16.msra.mxu0 %v352
    %420 = vmatprep.subr.bf16.mxu0 %v351
    %421 = vmatpush1.bf16.msra.mxu0 %v350
    %422 = vmatprep.subr.bf16.mxu0 %v349
    %423 = vmatpush1.bf16.msra.mxu0 %v348
    %424 = vmatprep.subr.bf16.mxu0 %v347
    %425 = vmatpush1.bf16.msra.mxu0 %v346
    %426 = vmatprep.subr.bf16.mxu0 %v377
    %427 = vmatpush2.bf16.msra.mxu0 %v376
    %428 = vmatprep.subr.bf16.mxu0 %v375
    %429 = vmatpush2.bf16.msra.mxu0 %v374
    %430 = vmatprep.subr.bf16.mxu0 %v373
    %431 = vmatpush2.bf16.msra.mxu0 %v372
    %432 = vmatprep.subr.bf16.mxu0 %v371
    %433 = vmatpush2.bf16.msra.mxu0 %v370
    %434 = vmatprep.subr.bf16.mxu0 %v369
    %435 = vmatpush2.bf16.msra.mxu0 %v368
    %436 = vmatprep.subr.bf16.mxu0 %v367
    %437 = vmatpush2.bf16.msra.mxu0 %v366
    %438 = vmatprep.subr.bf16.mxu0 %v365
    %439 = vmatpush2.bf16.msra.mxu0 %v364
    %440 = vmatprep.subr.bf16.mxu0 %v363
    %441 = vmatpush2.bf16.msra.mxu0 %v362
    %442 = vmatprep.mubr.bf16.mxu0 %v205
    %443 = vmatmul.mubr.bf16.gmra.mxu0 %v204
    %v444 = vpop.f32.mrf.mxu0
    %v445 = vadd.f32 %v243, %v444
    %v446 = vpop.f32.mrf.mxu0
    %v447 = vadd.f32 %v247, %v446
    %v448 = vpop.f32.mrf.mxu0
    %v449 = vadd.f32 %v243, %v448
    %v450 = vpop.f32.mrf.mxu0
    %v451 = vadd.f32 %v247, %v450
    %452 = vdwg.mxu0
    %v453 = vmax.f32 %v445, 0.0
    %v454 = vmax.f32 %v447, 0.0
    %v455 = vmax.f32 %v449, 0.0
    %v456 = vmax.f32 %v451, 0.0
    %v457 = vpack.c.bf16 %v455, %v453
    %v458 = vpack.c.bf16 %v456, %v454
    %v459 = vld [vmem:[#allocation8] sm:$0xff]
    %v460 = vld [vmem:[#allocation8 + $0x8] sm:$0xff]
    %v461 = vld [vmem:[#allocation8 + $0x10] sm:$0xff]
    %v462 = vld [vmem:[#allocation8 + $0x18] sm:$0xff]
    %v463 = vld [vmem:[#allocation8 + $0x20] sm:$0xff]
    %v464 = vld [vmem:[#allocation8 + $0x28] sm:$0xff]
    %v465 = vld [vmem:[#allocation8 + $0x30] sm:$0xff]
    %v466 = vld [vmem:[#allocation8 + $0x38] sm:$0xff]
    %v467 = vld [vmem:[#allocation8 + $0x40] sm:$0xff]
    %v468 = vld [vmem:[#allocation8 + $0x48] sm:$0xff]
    %v469 = vld [vmem:[#allocation8 + $0x50] sm:$0xff]
    %v470 = vld [vmem:[#allocation8 + $0x58] sm:$0xff]
    %v471 = vld [vmem:[#allocation8 + $0x60] sm:$0xff]
    %v472 = vld [vmem:[#allocation8 + $0x68] sm:$0xff]
    %v473 = vld [vmem:[#allocation8 + $0x70] sm:$0xff]
    %v474 = vld [vmem:[#allocation8 + $0x78] sm:$0xff]
    %v475 = vld [vmem:[#allocation8 + $0x80] sm:$0xff]
    %v476 = vld [vmem:[#allocation8 + $0x88] sm:$0xff]
    %v477 = vld [vmem:[#allocation8 + $0x90] sm:$0xff]
    %v478 = vld [vmem:[#allocation8 + $0x98] sm:$0xff]
    %v479 = vld [vmem:[#allocation8 + $0xa0] sm:$0xff]
    %v480 = vld [vmem:[#allocation8 + $0xa8] sm:$0xff]
    %v481 = vld [vmem:[#allocation8 + $0xb0] sm:$0xff]
    %v482 = vld [vmem:[#allocation8 + $0xb8] sm:$0xff]
    %v483 = vld [vmem:[#allocation8 + $0xc0] sm:$0xff]
    %v484 = vld [vmem:[#allocation8 + $0xc8] sm:$0xff]
    %v485 = vld [vmem:[#allocation8 + $0xd0] sm:$0xff]
    %v486 = vld [vmem:[#allocation8 + $0xd8] sm:$0xff]
    %v487 = vld [vmem:[#allocation8 + $0xe0] sm:$0xff]
    %v488 = vld [vmem:[#allocation8 + $0xe8] sm:$0xff]
    %v489 = vld [vmem:[#allocation8 + $0xf0] sm:$0xff]
    %v490 = vld [vmem:[#allocation8 + $0xf8] sm:$0xff]
    %v491 = vld [vmem:[%s6] sm:$0x3]
    %v493 = vlaneseq
    %v494 = vshrl.u32 %v493, 7
    %v495 = vsub.s32 0, %v494
    %v496 = vrot.slane %v491, %v495
    %v497 = vlaneseq
    %v498 = vshrl.u32 %v497, 7
    %v499 = vsub.s32 1, %v498
    %v500 = vrot.slane %v491, %v499
    %v535 = vunpack.c.l.b16 %v459
    %v536 = vunpack.c.h.b16 %v459
    %v537 = vunpack.c.l.b16 %v460
    %v538 = vunpack.c.h.b16 %v460
    %v539 = vunpack.c.l.b16 %v461
    %v540 = vunpack.c.h.b16 %v461
    %v541 = vunpack.c.l.b16 %v462
    %v542 = vunpack.c.h.b16 %v462
    %v543 = vunpack.c.l.b16 %v463
    %v544 = vunpack.c.h.b16 %v463
    %v545 = vunpack.c.l.b16 %v464
    %v546 = vunpack.c.h.b16 %v464
    %v547 = vunpack.c.l.b16 %v465
    %v548 = vunpack.c.h.b16 %v465
    %v549 = vunpack.c.l.b16 %v466
    %v550 = vunpack.c.h.b16 %v466
    %v551 = vunpack.c.l.b16 %v467
    %v552 = vunpack.c.h.b16 %v467
    %v553 = vunpack.c.l.b16 %v468
    %v554 = vunpack.c.h.b16 %v468
    %v555 = vunpack.c.l.b16 %v469
    %v556 = vunpack.c.h.b16 %v469
    %v557 = vunpack.c.l.b16 %v470
    %v558 = vunpack.c.h.b16 %v470
    %v559 = vunpack.c.l.b16 %v471
    %v560 = vunpack.c.h.b16 %v471
    %v561 = vunpack.c.l.b16 %v472
    %v562 = vunpack.c.h.b16 %v472
    %v563 = vunpack.c.l.b16 %v473
    %v564 = vunpack.c.h.b16 %v473
    %v565 = vunpack.c.l.b16 %v474
    %v566 = vunpack.c.h.b16 %v474
    %v567 = vunpack.c.l.b16 %v475
    %v568 = vunpack.c.h.b16 %v475
    %v569 = vunpack.c.l.b16 %v476
    %v570 = vunpack.c.h.b16 %v476
    %v571 = vunpack.c.l.b16 %v477
    %v572 = vunpack.c.h.b16 %v477
    %v573 = vunpack.c.l.b16 %v478
    %v574 = vunpack.c.h.b16 %v478
    %v575 = vunpack.c.l.b16 %v479
    %v576 = vunpack.c.h.b16 %v479
    %v577 = vunpack.c.l.b16 %v480
    %v578 = vunpack.c.h.b16 %v480
    %v579 = vunpack.c.l.b16 %v481
    %v580 = vunpack.c.h.b16 %v481
    %v581 = vunpack.c.l.b16 %v482
    %v582 = vunpack.c.h.b16 %v482
    %v583 = vunpack.c.l.b16 %v483
    %v584 = vunpack.c.h.b16 %v483
    %v585 = vunpack.c.l.b16 %v484
    %v586 = vunpack.c.h.b16 %v484
    %v587 = vunpack.c.l.b16 %v485
    %v588 = vunpack.c.h.b16 %v485
    %v589 = vunpack.c.l.b16 %v486
    %v590 = vunpack.c.h.b16 %v486
    %v591 = vunpack.c.l.b16 %v487
    %v592 = vunpack.c.h.b16 %v487
    %v593 = vunpack.c.l.b16 %v488
    %v594 = vunpack.c.h.b16 %v488
    %v595 = vunpack.c.l.b16 %v489
    %v596 = vunpack.c.h.b16 %v489
    %v597 = vunpack.c.l.b16 %v490
    %v598 = vunpack.c.h.b16 %v490
    %v599 = vpack.c.b16 %v537, %v535
    %v600 = vpack.c.b16 %v538, %v536
    %v601 = vpack.c.b16 %v541, %v539
    %v602 = vpack.c.b16 %v542, %v540
    %v603 = vpack.c.b16 %v545, %v543
    %v604 = vpack.c.b16 %v546, %v544
    %v605 = vpack.c.b16 %v549, %v547
    %v606 = vpack.c.b16 %v550, %v548
    %v607 = vpack.c.b16 %v553, %v551
    %v608 = vpack.c.b16 %v554, %v552
    %v609 = vpack.c.b16 %v557, %v555
    %v610 = vpack.c.b16 %v558, %v556
    %v611 = vpack.c.b16 %v561, %v559
    %v612 = vpack.c.b16 %v562, %v560
    %v613 = vpack.c.b16 %v565, %v563
    %v614 = vpack.c.b16 %v566, %v564
    %v615 = vpack.c.b16 %v569, %v567
    %v616 = vpack.c.b16 %v570, %v568
    %v617 = vpack.c.b16 %v573, %v571
    %v618 = vpack.c.b16 %v574, %v572
    %v619 = vpack.c.b16 %v577, %v575
    %v620 = vpack.c.b16 %v578, %v576
    %v621 = vpack.c.b16 %v581, %v579
    %v622 = vpack.c.b16 %v582, %v580
    %v623 = vpack.c.b16 %v585, %v583
    %v624 = vpack.c.b16 %v586, %v584
    %v625 = vpack.c.b16 %v589, %v587
    %v626 = vpack.c.b16 %v590, %v588
    %v627 = vpack.c.b16 %v593, %v591
    %v628 = vpack.c.b16 %v594, %v592
    %v629 = vpack.c.b16 %v597, %v595
    %v630 = vpack.c.b16 %v598, %v596
    %663 = vmatprep.subr.bf16.mxu0 %v614
    %664 = vmatpush1.bf16.msra.mxu0 %v613
    %665 = vmatprep.subr.bf16.mxu0 %v612
    %666 = vmatpush1.bf16.msra.mxu0 %v611
    %667 = vmatprep.subr.bf16.mxu0 %v610
    %668 = vmatpush1.bf16.msra.mxu0 %v609
    %669 = vmatprep.subr.bf16.mxu0 %v608
    %670 = vmatpush1.bf16.msra.mxu0 %v607
    %671 = vmatprep.subr.bf16.mxu0 %v606
    %672 = vmatpush1.bf16.msra.mxu0 %v605
    %673 = vmatprep.subr.bf16.mxu0 %v604
    %674 = vmatpush1.bf16.msra.mxu0 %v603
    %675 = vmatprep.subr.bf16.mxu0 %v602
    %676 = vmatpush1.bf16.msra.mxu0 %v601
    %677 = vmatprep.subr.bf16.mxu0 %v600
    %678 = vmatpush1.bf16.msra.mxu0 %v599
    %679 = vmatprep.subr.bf16.mxu0 %v630
    %680 = vmatpush2.bf16.msra.mxu0 %v629
    %681 = vmatprep.subr.bf16.mxu0 %v628
    %682 = vmatpush2.bf16.msra.mxu0 %v627
    %683 = vmatprep.subr.bf16.mxu0 %v626
    %684 = vmatpush2.bf16.msra.mxu0 %v625
    %685 = vmatprep.subr.bf16.mxu0 %v624
    %686 = vmatpush2.bf16.msra.mxu0 %v623
    %687 = vmatprep.subr.bf16.mxu0 %v622
    %688 = vmatpush2.bf16.msra.mxu0 %v621
    %689 = vmatprep.subr.bf16.mxu0 %v620
    %690 = vmatpush2.bf16.msra.mxu0 %v619
    %691 = vmatprep.subr.bf16.mxu0 %v618
    %692 = vmatpush2.bf16.msra.mxu0 %v617
    %693 = vmatprep.subr.bf16.mxu0 %v616
    %694 = vmatpush2.bf16.msra.mxu0 %v615
    %695 = vmatprep.mubr.bf16.mxu0 %v458
    %696 = vmatmul.mubr.bf16.gmra.mxu0 %v457
    %v697 = vpop.f32.mrf.mxu0
    %v698 = vadd.f32 %v496, %v697
    %v699 = vpop.f32.mrf.mxu0
    %v700 = vadd.f32 %v500, %v699
    %v701 = vpop.f32.mrf.mxu0
    %v702 = vadd.f32 %v496, %v701
    %v703 = vpop.f32.mrf.mxu0
    %v704 = vadd.f32 %v500, %v703
    %705 = vdwg.mxu0
    %v706 = vmax.f32 %v698, 0.0
    %v707 = vmax.f32 %v700, 0.0
    %v708 = vmax.f32 %v702, 0.0
    %v709 = vmax.f32 %v704, 0.0
    %v710 = vpack.c.bf16 %v708, %v706
    %v711 = vpack.c.bf16 %v709, %v707
    %v712 = vld [vmem:[#allocation10] sm:$0xf]
    %v713 = vld [vmem:[#allocation10 + $0x4] sm:$0xf]
    %v714 = vld [vmem:[#allocation10 + $0x8] sm:$0xf]
    %v715 = vld [vmem:[#allocation10 + $0xc] sm:$0xf]
    %v716 = vld [vmem:[#allocation10 + $0x10] sm:$0xf]
    %v717 = vld [vmem:[#allocation10 + $0x14] sm:$0xf]
    %v718 = vld [vmem:[#allocation10 + $0x18] sm:$0xf]
    %v719 = vld [vmem:[#allocation10 + $0x1c] sm:$0xf]
    %v720 = vld [vmem:[#allocation10 + $0x20] sm:$0xf]
    %v721 = vld [vmem:[#allocation10 + $0x24] sm:$0xf]
    %v722 = vld [vmem:[#allocation10 + $0x28] sm:$0xf]
    %v723 = vld [vmem:[#allocation10 + $0x2c] sm:$0xf]
    %v724 = vld [vmem:[#allocation10 + $0x30] sm:$0xf]
    %v725 = vld [vmem:[#allocation10 + $0x34] sm:$0xf]
    %v726 = vld [vmem:[#allocation10 + $0x38] sm:$0xf]
    %v727 = vld [vmem:[#allocation10 + $0x3c] sm:$0xf]
    %v728 = vld [vmem:[#allocation10 + $0x40] sm:$0xf]
    %v729 = vld [vmem:[#allocation10 + $0x44] sm:$0xf]
    %v730 = vld [vmem:[#allocation10 + $0x48] sm:$0xf]
    %v731 = vld [vmem:[#allocation10 + $0x4c] sm:$0xf]
    %v732 = vld [vmem:[#allocation10 + $0x50] sm:$0xf]
    %v733 = vld [vmem:[#allocation10 + $0x54] sm:$0xf]
    %v734 = vld [vmem:[#allocation10 + $0x58] sm:$0xf]
    %v735 = vld [vmem:[#allocation10 + $0x5c] sm:$0xf]
    %v736 = vld [vmem:[#allocation10 + $0x60] sm:$0xf]
    %v737 = vld [vmem:[#allocation10 + $0x64] sm:$0xf]
    %v738 = vld [vmem:[#allocation10 + $0x68] sm:$0xf]
    %v739 = vld [vmem:[#allocation10 + $0x6c] sm:$0xf]
    %v740 = vld [vmem:[#allocation10 + $0x70] sm:$0xf]
    %v741 = vld [vmem:[#allocation10 + $0x74] sm:$0xf]
    %v742 = vld [vmem:[#allocation10 + $0x78] sm:$0xf]
    %v743 = vld [vmem:[#allocation10 + $0x7c] sm:$0xf]
    %v744 = vld [vmem:[%s8] sm:$0x1]
    %v746 = vlaneseq
    %v747 = vshrl.u32 %v746, 7
    %v748 = vsub.s32 0, %v747
    %v749 = vrot.slane %v744, %v748
    %v783 = vunpack.c.l.b16 %v712
    %v784 = vunpack.c.l.b16 %v713
    %v785 = vunpack.c.l.b16 %v714
    %v786 = vunpack.c.l.b16 %v715
    %v787 = vunpack.c.l.b16 %v716
    %v788 = vunpack.c.l.b16 %v717
    %v789 = vunpack.c.l.b16 %v718
    %v790 = vunpack.c.l.b16 %v719
    %v791 = vunpack.c.l.b16 %v720
    %v792 = vunpack.c.l.b16 %v721
    %v793 = vunpack.c.l.b16 %v722
    %v794 = vunpack.c.l.b16 %v723
    %v795 = vunpack.c.l.b16 %v724
    %v796 = vunpack.c.l.b16 %v725
    %v797 = vunpack.c.l.b16 %v726
    %v798 = vunpack.c.l.b16 %v727
    %v799 = vunpack.c.l.b16 %v728
    %v800 = vunpack.c.l.b16 %v729
    %v801 = vunpack.c.l.b16 %v730
    %v802 = vunpack.c.l.b16 %v731
    %v803 = vunpack.c.l.b16 %v732
    %v804 = vunpack.c.l.b16 %v733
    %v805 = vunpack.c.l.b16 %v734
    %v806 = vunpack.c.l.b16 %v735
    %v807 = vunpack.c.l.b16 %v736
    %v808 = vunpack.c.l.b16 %v737
    %v809 = vunpack.c.l.b16 %v738
    %v810 = vunpack.c.l.b16 %v739
    %v811 = vunpack.c.l.b16 %v740
    %v812 = vunpack.c.l.b16 %v741
    %v813 = vunpack.c.l.b16 %v742
    %v814 = vunpack.c.l.b16 %v743
    %v815 = vpack.c.b16 %v784, %v783
    %v816 = vpack.c.b16 %v786, %v785
    %v817 = vpack.c.b16 %v788, %v787
    %v818 = vpack.c.b16 %v790, %v789
    %v819 = vpack.c.b16 %v792, %v791
    %v820 = vpack.c.b16 %v794, %v793
    %v821 = vpack.c.b16 %v796, %v795
    %v822 = vpack.c.b16 %v798, %v797
    %v823 = vpack.c.b16 %v800, %v799
    %v824 = vpack.c.b16 %v802, %v801
    %v825 = vpack.c.b16 %v804, %v803
    %v826 = vpack.c.b16 %v806, %v805
    %v827 = vpack.c.b16 %v808, %v807
    %v828 = vpack.c.b16 %v810, %v809
    %v829 = vpack.c.b16 %v812, %v811
    %v830 = vpack.c.b16 %v814, %v813
    %847 = vmatprep.subr.bf16.mxu0 0
    %848 = vmatpush1.bf16.msra.mxu0 %v822
    %849 = vmatprep.subr.bf16.mxu0 0
    %850 = vmatpush1.bf16.msra.mxu0 %v821
    %851 = vmatprep.subr.bf16.mxu0 0
    %852 = vmatpush1.bf16.msra.mxu0 %v820
    %853 = vmatprep.subr.bf16.mxu0 0
    %854 = vmatpush1.bf16.msra.mxu0 %v819
    %855 = vmatprep.subr.bf16.mxu0 0
    %856 = vmatpush1.bf16.msra.mxu0 %v818
    %857 = vmatprep.subr.bf16.mxu0 0
    %858 = vmatpush1.bf16.msra.mxu0 %v817
    %859 = vmatprep.subr.bf16.mxu0 0
    %860 = vmatpush1.bf16.msra.mxu0 %v816
    %861 = vmatprep.subr.bf16.mxu0 0
    %862 = vmatpush1.bf16.msra.mxu0 %v815
    %863 = vmatprep.subr.bf16.mxu0 0
    %864 = vmatpush2.bf16.msra.mxu0 %v830
    %865 = vmatprep.subr.bf16.mxu0 0
    %866 = vmatpush2.bf16.msra.mxu0 %v829
    %867 = vmatprep.subr.bf16.mxu0 0
    %868 = vmatpush2.bf16.msra.mxu0 %v828
    %869 = vmatprep.subr.bf16.mxu0 0
    %870 = vmatpush2.bf16.msra.mxu0 %v827
    %871 = vmatprep.subr.bf16.mxu0 0
    %872 = vmatpush2.bf16.msra.mxu0 %v826
    %873 = vmatprep.subr.bf16.mxu0 0
    %874 = vmatpush2.bf16.msra.mxu0 %v825
    %875 = vmatprep.subr.bf16.mxu0 0
    %876 = vmatpush2.bf16.msra.mxu0 %v824
    %877 = vmatprep.subr.bf16.mxu0 0
    %878 = vmatpush2.bf16.msra.mxu0 %v823
    %879 = vmatprep.mubr.bf16.mxu0 %v711
    %880 = vmatmul.mubr.bf16.gmra.mxu0 %v710
    %v881 = vpop.f32.mrf.mxu0
    %v882 = vadd.f32 %v749, %v881
    %v883 = vpop.f32.mrf.mxu0
    %v884 = vpop.f32.mrf.mxu0
    %v885 = vadd.f32 %v749, %v884
    %v886 = vpop.f32.mrf.mxu0
    %887 = vdwg.mxu0
    %v888 = vmax.f32 %v882, 0.0
    %v889 = vmax.f32 %v885, 0.0
    %v890 = vpack.c.bf16 %v889, %v888
    %v891 = vld [vmem:[#allocation11] sm:$0xf]
    %v892 = vld [vmem:[#allocation11 + $0x4] sm:$0xf]
    %v893 = vld [vmem:[#allocation11 + $0x8] sm:$0xf]
    %v894 = vld [vmem:[#allocation11 + $0xc] sm:$0xf]
    %v895 = vld [vmem:[#allocation11 + $0x10] sm:$0xf]
    %v896 = vld [vmem:[#allocation11 + $0x14] sm:$0xf]
    %v897 = vld [vmem:[#allocation11 + $0x18] sm:$0xf]
    %v898 = vld [vmem:[#allocation11 + $0x1c] sm:$0xf]
    %v899 = vld [vmem:[#allocation11 + $0x20] sm:$0xf]
    %v900 = vld [vmem:[#allocation11 + $0x24] sm:$0xf]
    %v901 = vld [vmem:[#allocation11 + $0x28] sm:$0xf]
    %v902 = vld [vmem:[#allocation11 + $0x2c] sm:$0xf]
    %v903 = vld [vmem:[#allocation11 + $0x30] sm:$0xf]
    %v904 = vld [vmem:[#allocation11 + $0x34] sm:$0xf]
    %v905 = vld [vmem:[#allocation11 + $0x38] sm:$0xf]
    %v906 = vld [vmem:[#allocation11 + $0x3c] sm:$0xf]
    %v907 = vld [vmem:[%s10] sm:$0x1]
    %v909 = vlaneseq
    %v910 = vshrl.u32 %v909, 7
    %v911 = vsub.s32 0, %v910
    %v912 = vrot.slane %v907, %v911
    %v930 = vunpack.c.l.b16 %v891
    %v931 = vunpack.c.l.b16 %v892
    %v932 = vunpack.c.l.b16 %v893
    %v933 = vunpack.c.l.b16 %v894
    %v934 = vunpack.c.l.b16 %v895
    %v935 = vunpack.c.l.b16 %v896
    %v936 = vunpack.c.l.b16 %v897
    %v937 = vunpack.c.l.b16 %v898
    %v938 = vunpack.c.l.b16 %v899
    %v939 = vunpack.c.l.b16 %v900
    %v940 = vunpack.c.l.b16 %v901
    %v941 = vunpack.c.l.b16 %v902
    %v942 = vunpack.c.l.b16 %v903
    %v943 = vunpack.c.l.b16 %v904
    %v944 = vunpack.c.l.b16 %v905
    %v945 = vunpack.c.l.b16 %v906
    %v946 = vpack.c.b16 %v931, %v930
    %v947 = vpack.c.b16 %v933, %v932
    %v948 = vpack.c.b16 %v935, %v934
    %v949 = vpack.c.b16 %v937, %v936
    %v950 = vpack.c.b16 %v939, %v938
    %v951 = vpack.c.b16 %v941, %v940
    %v952 = vpack.c.b16 %v943, %v942
    %v953 = vpack.c.b16 %v945, %v944
    %962 = vmatprep.subr.bf16.mxu0 0
    %963 = vmatpush1.bf16.msra.mxu0 %v953
    %964 = vmatprep.subr.bf16.mxu0 0
    %965 = vmatpush1.bf16.msra.mxu0 %v952
    %966 = vmatprep.subr.bf16.mxu0 0
    %967 = vmatpush1.bf16.msra.mxu0 %v951
    %968 = vmatprep.subr.bf16.mxu0 0
    %969 = vmatpush1.bf16.msra.mxu0 %v950
    %970 = vmatprep.subr.bf16.mxu0 0
    %971 = vmatpush1.bf16.msra.mxu0 %v949
    %972 = vmatprep.subr.bf16.mxu0 0
    %973 = vmatpush1.bf16.msra.mxu0 %v948
    %974 = vmatprep.subr.bf16.mxu0 0
    %975 = vmatpush1.bf16.msra.mxu0 %v947
    %976 = vmatprep.subr.bf16.mxu0 0
    %977 = vmatpush1.bf16.msra.mxu0 %v946
    %978 = vmatprep.subr.bf16.mxu0 0
    %979 = vmatpush2.bf16.msra.mxu0 0
    %980 = vmatprep.subr.bf16.mxu0 0
    %981 = vmatpush2.bf16.msra.mxu0 0
    %982 = vmatprep.subr.bf16.mxu0 0
    %983 = vmatpush2.bf16.msra.mxu0 0
    %984 = vmatprep.subr.bf16.mxu0 0
    %985 = vmatpush2.bf16.msra.mxu0 0
    %986 = vmatprep.subr.bf16.mxu0 0
    %987 = vmatpush2.bf16.msra.mxu0 0
    %988 = vmatprep.subr.bf16.mxu0 0
    %989 = vmatpush2.bf16.msra.mxu0 0
    %990 = vmatprep.subr.bf16.mxu0 0
    %991 = vmatpush2.bf16.msra.mxu0 0
    %992 = vmatprep.subr.bf16.mxu0 0
    %993 = vmatpush2.bf16.msra.mxu0 0
    %994 = vmatprep.mubr.bf16.mxu0 0
    %995 = vmatmul.mubr.bf16.gmra.mxu0 %v890
    %v996 = vpop.f32.mrf.mxu0
    %v997 = vadd.f32 %v912, %v996
    %v998 = vpop.f32.mrf.mxu0
    %v999 = vpop.f32.mrf.mxu0
    %v1000 = vadd.f32 %v912, %v999
    %v1001 = vpop.f32.mrf.mxu0
    %1002 = vdwg.mxu0
    %1003 = vst [vmem:[#allocation13] sm:$0xff] %v997
    %1004 = vst [vmem:[#allocation13 + $0x8] sm:$0xff] %v1000
    // Predicated region
    $region70: #{tpu_custom_call.1} parent=1 // pred_check
      _
    $region71: #{tpu_custom_call.1} parent=1 // pred_check_branch
      %1006 = sbr.rel (0) target = $region73
    $region72: #{tpu_custom_call.1} parent=1 // pred_region
      %s1008 = ssub.s32 256, 256
      %1009 = vsyncadd [#allocation4], %s1008
      %s1010 = sshll.u32 [#allocation13], 4
      %s1011 = int_to_ptr.vmem [resolvable:$true] %s1010
      %1016 = dma.vmem_to_hbm [thread:$0]  %s1011, 256, %s11, [#allocation4], 128, 128, 8
    $region73: #{tpu_custom_call.1} parent=1 // pred_fallthru
      _
    // Predicated region
    $region74: #{tpu_custom_call.1} parent=1 // pred_check
      _
    $region75: #{tpu_custom_call.1} parent=1 // pred_check_branch
      %1018 = sbr.rel (0) target = $region77
    $region76: #{tpu_custom_call.1} parent=1 // pred_region
      %1019 = dma.done [#allocation4], 256
    $region77: #{tpu_custom_call.1} parent=1 // pred_fallthru
      _
    %1020 = vsyncpa [#allocation3], 1
    %1021 = vsyncpa [#allocation6], 1
    %1022 = vsyncpa [#allocation9], 1
    %1023 = vsyncpa [#allocation12], 1
    %1024 = vsyncpa [#allocation4], 1

</llo_original>
